<compile_context>
chip_gen: v7x
topology: tpu7x:2x2x1
jax: 0.10.0
libtpu: 0.0.40
codegen_flags: <defaults>
</compile_context>

<pallas_src>
import jax
import jax.numpy as jnp
from jax.experimental import pallas as pl
from jax.experimental.pallas import tpu as pltpu


def _top5_indices(logits):
    """Top-5 indices per row, descending, ties -> smallest index (f32 input)."""
    B, T = logits.shape
    tag_iota = jax.lax.broadcasted_iota(jnp.int32, (B, T), 1)
    col_iota = jax.lax.broadcasted_iota(jnp.int32, (B, 5), 1)

    out = jnp.zeros((B, 5), jnp.int32)
    cur = logits
    for i in range(5):  # unrolled: 5 argmax rounds
        mx = jnp.max(cur, axis=-1, keepdims=True)
        idx = jnp.min(jnp.where(cur == mx, tag_iota, T),
                      axis=-1, keepdims=True)            # (B, 1) int32
        out = jnp.where(col_iota == i, idx, out)          # lane-select, no concat
        cur = jnp.where(tag_iota == idx, -jnp.inf, cur)   # knock out selected tag
    return out


def mlc_single_block_kernel(x_ref, wt_ref, b_ref, idx_ref):
    # Whole-K block: no accumulator scratch, no pl.when branches.
    # x_ref : (B, K) f32 ; wt_ref : (K, T) bf16 ; b_ref : (1, T) f32
    x = x_ref[...].astype(wt_ref.dtype)          # in-kernel cast (hidden under DMA)
    logits = jnp.dot(x, wt_ref[...],
                     preferred_element_type=jnp.float32) + b_ref[...]
    idx_ref[...] = _top5_indices(logits)


def mlc_tiled_kernel(x_ref, wt_ref, b_ref, idx_ref, acc_ref):
    # K is a reduction grid axis; acc_ref (B, T) f32 persists across K tiles.
    k = pl.program_id(0)

    @pl.when(k == 0)
    def _init():
        # Bias folded into the accumulator init (saves a (B, T) add at the end).
        acc_ref[...] = jnp.broadcast_to(b_ref[...], acc_ref.shape)

    x = x_ref[...].astype(wt_ref.dtype)          # in-kernel bf16 cast
    acc_ref[...] += jnp.dot(x, wt_ref[...],
                            preferred_element_type=jnp.float32)

    @pl.when(k == pl.num_programs(0) - 1)
    def _finalize():
        # Softmax intentionally omitted: monotonic per row, same top-5 indices.
        idx_ref[...] = _top5_indices(acc_ref[...])


def mlc_forward(visual_features, wt_kt, bias_1t, *,
                block_k=None, vmem_budget_bytes=None):
    """visual_features: (B, num_pixels, encoder_dim) float32
       wt_kt : (K, T) weight — pre-transposed from the nn.Linear (T, K) layout
               and pre-cast (bf16) once at model-load time, NOT per call.
       bias_1t: (1, T) float32."""
    B = visual_features.shape[0]
    K, T = wt_kt.shape
    assert T >= 5, "top-5 selection requires at least 5 tags"
    x = visual_features.reshape(B, -1)           # stays f32; cast inside kernel
    assert x.shape[1] == K

    # ---- per-generation VMEM budget (v7x has only 64 MiB physical) ----------
    if vmem_budget_bytes is None:
        try:
            phys = pltpu.get_tpu_info().vmem_capacity_bytes
        except Exception:
            phys = 64 << 20                      # conservative default (v7x)
        vmem_budget_bytes = int(phys // 2)       # leave headroom for the compiler
    vmem_budget_bytes = int(vmem_budget_bytes)

    # ---- choose block_k: whole K if it fits, else fill the VMEM budget ------
    w_row = T * wt_kt.dtype.itemsize             # bytes of one weight K-row
    x_row = B * x.dtype.itemsize                 # bytes of one activation K-col
    fixed = B * T * 4 + 2 * B * 5 * 4 + 2 * T * 4  # acc + out + bias buffers

    if block_k is None:
        if K * 2 * (w_row + x_row) + fixed <= vmem_budget_bytes:
            block_k = K                          # single grid step (fast path)
        else:
            block_k = (vmem_budget_bytes - fixed) // (2 * (w_row + x_row))
            block_k = max(128, (block_k // 128) * 128)
    block_k = int(min(block_k, K))
    if block_k < K and block_k % 128 != 0:       # lane constraint on x block
        block_k = max(128, (block_k // 128) * 128)

    n_k = pl.cdiv(K, block_k)
    K_pad = n_k * block_k
    if K_pad != K:
        # Zero rows of x / W do not change the logits.
        # TODO(synk): pre-pad the weight once at model-load time in production.
        x = jnp.pad(x, ((0, 0), (0, K_pad - K)))
        wt_kt = jnp.pad(wt_kt, ((0, K_pad - K), (0, 0)))

    if n_k == 1:
        kernel = mlc_single_block_kernel
        scratch = []
    else:
        kernel = mlc_tiled_kernel
        scratch = [pltpu.VMEM((B, T), jnp.float32)]   # f32 accumulator

    bytes_accessed = (x.size * x.dtype.itemsize
                      + wt_kt.size * wt_kt.dtype.itemsize
                      + bias_1t.size * 4
                      + B * 5 * 4)

    return pl.pallas_call(
        kernel,
        out_shape=jax.ShapeDtypeStruct((B, 5), jnp.int32),
        grid_spec=pltpu.PrefetchScalarGridSpec(
            num_scalar_prefetch=0,
            grid=(n_k,),
            in_specs=[
                pl.BlockSpec((B, block_k), lambda k: (0, k)),   # activations (f32)
                pl.BlockSpec((block_k, T), lambda k: (k, 0)),   # weight tile (bf16)
                pl.BlockSpec((1, T), lambda k: (0, 0)),         # bias
            ],
            out_specs=pl.BlockSpec((B, 5), lambda k: (0, 0)),
            scratch_shapes=scratch,
        ),
        compiler_params=pltpu.CompilerParams(
            dimension_semantics=("arbitrary",),                 # K is a reduction
            vmem_limit_bytes=vmem_budget_bytes),
        cost_estimate=pl.CostEstimate(
            flops=2 * B * K_pad * T,
            transcendentals=0,
            bytes_accessed=bytes_accessed),
    )(x, wt_kt, bias_1t)


if __name__ == "__main__":
    # Small shapes consistent with the module.
    batch = 2
    num_pixels = 16
    encoder_dimension = 32
    tag_dimension = 128
    # vocab_size / embed_dim (embedding) and the resnet layers are unused in forward().

    key = jax.random.PRNGKey(0)
    k_x, k_w = jax.random.split(key)

    visual_features = jax.random.normal(
        k_x, (batch, num_pixels, encoder_dimension), dtype=jnp.float32)

    # init_weights(): mlc.weight ~ U(-0.1, 0.1), mlc.bias = 0
    mlc_weight = jax.random.uniform(
        k_w, (tag_dimension, encoder_dimension * num_pixels),
        minval=-0.1, maxval=0.1, dtype=jnp.float32)
    mlc_bias = jnp.zeros((tag_dimension,), dtype=jnp.float32)

    # One-time (model-load) preprocessing: transpose to (K, T) and cast to bf16.
    wt_kt = jnp.asarray(mlc_weight.T, dtype=jnp.bfloat16)
    bias_1t = mlc_bias.reshape(1, tag_dimension).astype(jnp.float32)

    # Fast path: whole K in one block (no accumulator, no pl.when).
    top5_indices = mlc_forward(visual_features, wt_kt, bias_1t)
    top5_indices = jax.block_until_ready(top5_indices)

    # Also exercise the tiled reduction path (forced block_k) for compile coverage.
    top5_tiled = mlc_forward(visual_features, wt_kt, bias_1t, block_k=128)
    top5_tiled = jax.block_until_ready(top5_tiled)

    # Reference in plain JAX with the same numeric recipe (bf16 operands, f32
    # accumulation), mirroring the PyTorch forward:
    # linear -> softmax -> sort descending -> take first 5 indices.
    x_flat = visual_features.reshape(batch, -1).astype(jnp.bfloat16)
    logits_ref = jnp.dot(x_flat, wt_kt,
                         preferred_element_type=jnp.float32) + bias_1t
    probs_ref = jax.nn.softmax(logits_ref, axis=1)
    _, ref_idx = jax.lax.top_k(probs_ref, 5)
    ref_idx = ref_idx.astype(jnp.int32)

    assert top5_indices.shape == (batch, 5)
    assert jnp.array_equal(top5_indices, ref_idx)
    assert jnp.array_equal(top5_tiled, ref_idx)

    print("KERNEL_OK")
</pallas_src>

<mosaic_0001>
module attributes {stable_mosaic.version = 11 : i64} {
  func.func @mlc_single_block_kernel(%arg0: i32, %arg1: memref<2x512xf32, #tpu.memory_space<vmem>>, %arg2: memref<512x128xbf16, #tpu.memory_space<vmem>>, %arg3: memref<1x128xf32, #tpu.memory_space<vmem>>, %arg4: memref<2x5xi32, #tpu.memory_space<vmem>>) attributes {dimension_semantics = [#tpu.dimension_semantics<arbitrary>], iteration_bounds = array<i64: 1>, scalar_prefetch = 0 : i64, scratch_operands = 0 : i64, tpu.core_type = #tpu.core_type<tc>, window_params = [{transform_indices = @transform_0, window_bounds = array<i64: 2, 512>}, {transform_indices = @transform_1, window_bounds = array<i64: 512, 128>}, {pipeline_mode = #tpu.pipeline_mode<synchronous>, transform_indices = @transform_2, window_bounds = array<i64: 1, 128>}, {pipeline_mode = #tpu.pipeline_mode<synchronous>, transform_indices = @transform_3, window_bounds = array<i64: 2, 5>}]} {
    %c0 = arith.constant 0 : index
    %c0_0 = arith.constant 0 : index
    %0 = vector.load %arg1[%c0, %c0_0] : memref<2x512xf32, #tpu.memory_space<vmem>>, vector<2x512xf32>
    %1 = arith.truncf %0 : vector<2x512xf32> to vector<2x512xbf16>
    %c0_1 = arith.constant 0 : index
    %c0_2 = arith.constant 0 : index
    %2 = vector.load %arg2[%c0_1, %c0_2] : memref<512x128xbf16, #tpu.memory_space<vmem>>, vector<512x128xbf16>
    %cst = arith.constant dense<0.000000e+00> : vector<2x128xf32>
    %3 = tpu.matmul %1, %2, %cst {dimension_numbers = #tpu.dot_dimension_numbers<[1], [0], [0], [1], [0, 0, 1, 1], [], []>} : vector<2x512xbf16>, vector<512x128xbf16>, vector<2x128xf32> -> vector<2x128xf32>
    %c0_3 = arith.constant 0 : index
    %c0_4 = arith.constant 0 : index
    %4 = vector.load %arg3[%c0_3, %c0_4] : memref<1x128xf32, #tpu.memory_space<vmem>>, vector<1x128xf32>
    %5 = vector.broadcast %4 : vector<1x128xf32> to vector<2x128xf32>
    %6 = arith.addf %3, %5 : vector<2x128xf32>
    %7 = tpu.iota {dimensions = array<i32: 1>} : vector<2x128xi32>
    %8 = tpu.iota {dimensions = array<i32: 1>} : vector<2x5xi32>
    %c0_i32 = arith.constant 0 : i32
    %9 = vector.broadcast %c0_i32 : i32 to vector<2x5xi32>
    %cst_5 = arith.constant dense<0xFF800000> : vector<2xf32>
    %10 = vector.multi_reduction <maximumf>, %6, %cst_5 [1] : vector<2x128xf32> to vector<2xf32>
    %11 = vector.shape_cast %10 : vector<2xf32> to vector<2x1xf32>
    %12 = vector.broadcast %11 : vector<2x1xf32> to vector<2x128xf32>
    %13 = arith.cmpf oeq, %6, %12 : vector<2x128xf32>
    %c128_i32 = arith.constant 128 : i32
    %14 = vector.broadcast %c128_i32 : i32 to vector<2x128xi32>
    %15 = arith.select %13, %7, %14 : vector<2x128xi1>, vector<2x128xi32>
    %cst_6 = arith.constant dense<2147483647> : vector<2xi32>
    %16 = vector.multi_reduction <minsi>, %15, %cst_6 [1] : vector<2x128xi32> to vector<2xi32>
    %17 = vector.shape_cast %16 : vector<2xi32> to vector<2x1xi32>
    %c0_i32_7 = arith.constant 0 : i32
    %18 = vector.broadcast %c0_i32_7 : i32 to vector<2x5xi32>
    %19 = arith.cmpi eq, %8, %18 : vector<2x5xi32>
    %20 = vector.shape_cast %17 : vector<2x1xi32> to vector<2x1xi32>
    %21 = vector.broadcast %20 : vector<2x1xi32> to vector<2x5xi32>
    %22 = arith.select %19, %21, %9 : vector<2x5xi1>, vector<2x5xi32>
    %23 = vector.broadcast %17 : vector<2x1xi32> to vector<2x128xi32>
    %24 = arith.cmpi eq, %7, %23 : vector<2x128xi32>
    %cst_8 = arith.constant 0xFF800000 : f32
    %25 = vector.broadcast %cst_8 : f32 to vector<2x128xf32>
    %26 = arith.select %24, %25, %6 : vector<2x128xi1>, vector<2x128xf32>
    %cst_9 = arith.constant dense<0xFF800000> : vector<2xf32>
    %27 = vector.multi_reduction <maximumf>, %26, %cst_9 [1] : vector<2x128xf32> to vector<2xf32>
    %28 = vector.shape_cast %27 : vector<2xf32> to vector<2x1xf32>
    %29 = vector.broadcast %28 : vector<2x1xf32> to vector<2x128xf32>
    %30 = arith.cmpf oeq, %26, %29 : vector<2x128xf32>
    %c128_i32_10 = arith.constant 128 : i32
    %31 = vector.broadcast %c128_i32_10 : i32 to vector<2x128xi32>
    %32 = arith.select %30, %7, %31 : vector<2x128xi1>, vector<2x128xi32>
    %cst_11 = arith.constant dense<2147483647> : vector<2xi32>
    %33 = vector.multi_reduction <minsi>, %32, %cst_11 [1] : vector<2x128xi32> to vector<2xi32>
    %34 = vector.shape_cast %33 : vector<2xi32> to vector<2x1xi32>
    %c1_i32 = arith.constant 1 : i32
    %35 = vector.broadcast %c1_i32 : i32 to vector<2x5xi32>
    %36 = arith.cmpi eq, %8, %35 : vector<2x5xi32>
    %37 = vector.shape_cast %34 : vector<2x1xi32> to vector<2x1xi32>
    %38 = vector.broadcast %37 : vector<2x1xi32> to vector<2x5xi32>
    %39 = arith.select %36, %38, %22 : vector<2x5xi1>, vector<2x5xi32>
    %40 = vector.broadcast %34 : vector<2x1xi32> to vector<2x128xi32>
    %41 = arith.cmpi eq, %7, %40 : vector<2x128xi32>
    %cst_12 = arith.constant 0xFF800000 : f32
    %42 = vector.broadcast %cst_12 : f32 to vector<2x128xf32>
    %43 = arith.select %41, %42, %26 : vector<2x128xi1>, vector<2x128xf32>
    %cst_13 = arith.constant dense<0xFF800000> : vector<2xf32>
    %44 = vector.multi_reduction <maximumf>, %43, %cst_13 [1] : vector<2x128xf32> to vector<2xf32>
    %45 = vector.shape_cast %44 : vector<2xf32> to vector<2x1xf32>
    %46 = vector.broadcast %45 : vector<2x1xf32> to vector<2x128xf32>
    %47 = arith.cmpf oeq, %43, %46 : vector<2x128xf32>
    %c128_i32_14 = arith.constant 128 : i32
    %48 = vector.broadcast %c128_i32_14 : i32 to vector<2x128xi32>
    %49 = arith.select %47, %7, %48 : vector<2x128xi1>, vector<2x128xi32>
    %cst_15 = arith.constant dense<2147483647> : vector<2xi32>
    %50 = vector.multi_reduction <minsi>, %49, %cst_15 [1] : vector<2x128xi32> to vector<2xi32>
    %51 = vector.shape_cast %50 : vector<2xi32> to vector<2x1xi32>
    %c2_i32 = arith.constant 2 : i32
    %52 = vector.broadcast %c2_i32 : i32 to vector<2x5xi32>
    %53 = arith.cmpi eq, %8, %52 : vector<2x5xi32>
    %54 = vector.shape_cast %51 : vector<2x1xi32> to vector<2x1xi32>
    %55 = vector.broadcast %54 : vector<2x1xi32> to vector<2x5xi32>
    %56 = arith.select %53, %55, %39 : vector<2x5xi1>, vector<2x5xi32>
    %57 = vector.broadcast %51 : vector<2x1xi32> to vector<2x128xi32>
    %58 = arith.cmpi eq, %7, %57 : vector<2x128xi32>
    %cst_16 = arith.constant 0xFF800000 : f32
    %59 = vector.broadcast %cst_16 : f32 to vector<2x128xf32>
    %60 = arith.select %58, %59, %43 : vector<2x128xi1>, vector<2x128xf32>
    %cst_17 = arith.constant dense<0xFF800000> : vector<2xf32>
    %61 = vector.multi_reduction <maximumf>, %60, %cst_17 [1] : vector<2x128xf32> to vector<2xf32>
    %62 = vector.shape_cast %61 : vector<2xf32> to vector<2x1xf32>
    %63 = vector.broadcast %62 : vector<2x1xf32> to vector<2x128xf32>
    %64 = arith.cmpf oeq, %60, %63 : vector<2x128xf32>
    %c128_i32_18 = arith.constant 128 : i32
    %65 = vector.broadcast %c128_i32_18 : i32 to vector<2x128xi32>
    %66 = arith.select %64, %7, %65 : vector<2x128xi1>, vector<2x128xi32>
    %cst_19 = arith.constant dense<2147483647> : vector<2xi32>
    %67 = vector.multi_reduction <minsi>, %66, %cst_19 [1] : vector<2x128xi32> to vector<2xi32>
    %68 = vector.shape_cast %67 : vector<2xi32> to vector<2x1xi32>
    %c3_i32 = arith.constant 3 : i32
    %69 = vector.broadcast %c3_i32 : i32 to vector<2x5xi32>
    %70 = arith.cmpi eq, %8, %69 : vector<2x5xi32>
    %71 = vector.shape_cast %68 : vector<2x1xi32> to vector<2x1xi32>
    %72 = vector.broadcast %71 : vector<2x1xi32> to vector<2x5xi32>
    %73 = arith.select %70, %72, %56 : vector<2x5xi1>, vector<2x5xi32>
    %74 = vector.broadcast %68 : vector<2x1xi32> to vector<2x128xi32>
    %75 = arith.cmpi eq, %7, %74 : vector<2x128xi32>
    %cst_20 = arith.constant 0xFF800000 : f32
    %76 = vector.broadcast %cst_20 : f32 to vector<2x128xf32>
    %77 = arith.select %75, %76, %60 : vector<2x128xi1>, vector<2x128xf32>
    %cst_21 = arith.constant dense<0xFF800000> : vector<2xf32>
    %78 = vector.multi_reduction <maximumf>, %77, %cst_21 [1] : vector<2x128xf32> to vector<2xf32>
    %79 = vector.shape_cast %78 : vector<2xf32> to vector<2x1xf32>
    %80 = vector.broadcast %79 : vector<2x1xf32> to vector<2x128xf32>
    %81 = arith.cmpf oeq, %77, %80 : vector<2x128xf32>
    %c128_i32_22 = arith.constant 128 : i32
    %82 = vector.broadcast %c128_i32_22 : i32 to vector<2x128xi32>
    %83 = arith.select %81, %7, %82 : vector<2x128xi1>, vector<2x128xi32>
    %cst_23 = arith.constant dense<2147483647> : vector<2xi32>
    %84 = vector.multi_reduction <minsi>, %83, %cst_23 [1] : vector<2x128xi32> to vector<2xi32>
    %85 = vector.shape_cast %84 : vector<2xi32> to vector<2x1xi32>
    %c4_i32 = arith.constant 4 : i32
    %86 = vector.broadcast %c4_i32 : i32 to vector<2x5xi32>
    %87 = arith.cmpi eq, %8, %86 : vector<2x5xi32>
    %88 = vector.shape_cast %85 : vector<2x1xi32> to vector<2x1xi32>
    %89 = vector.broadcast %88 : vector<2x1xi32> to vector<2x5xi32>
    %90 = arith.select %87, %89, %73 : vector<2x5xi1>, vector<2x5xi32>
    %c0_24 = arith.constant 0 : index
    %c0_25 = arith.constant 0 : index
    %91 = vector.load %arg4[%c0_24, %c0_25] : memref<2x5xi32, #tpu.memory_space<vmem>>, vector<2x5xi32>
    tpu.vector_store %arg4[%c0_24, %c0_25], %90 {strides = array<i32>} : memref<2x5xi32, #tpu.memory_space<vmem>>, vector<2x5xi32>,
    return
  }
  func.func @transform_0(%arg0: i32) -> (i32, i32) {
    %c0_i32 = arith.constant 0 : i32
    %c0_i32_0 = arith.constant 0 : i32
    return %c0_i32, %arg0 : i32, i32
  }
  func.func @transform_1(%arg0: i32) -> (i32, i32) {
    %c0_i32 = arith.constant 0 : i32
    %c0_i32_0 = arith.constant 0 : i32
    return %arg0, %c0_i32 : i32, i32
  }
  func.func @transform_2(%arg0: i32) -> (i32, i32) {
    %c0_i32 = arith.constant 0 : i32
    %c0_i32_0 = arith.constant 0 : i32
    %c0_i32_1 = arith.constant 0 : i32
    return %c0_i32, %c0_i32_0 : i32, i32
  }
  func.func @transform_3(%arg0: i32) -> (i32, i32) {
    %c0_i32 = arith.constant 0 : i32
    %c0_i32_0 = arith.constant 0 : i32
    %c0_i32_1 = arith.constant 0 : i32
    return %c0_i32, %c0_i32_0 : i32, i32
  }
}

</mosaic_0001>

<llo_original>
// kernel: tpu_custom_call.1
$region0: #{tpu_custom_call.1}
  #allocation0 [shape = 'u32[]', space=smem, size = 0x4, offset = 0x4, fixed_abs, tag = 'smem constant byte address 0x4 - core index']
  #allocation1 [shape = 'u32[144,128]{1,0:T(1,128)}', space=vmem, size = 0x12000, scoped, tag = 'internal scratch']
  %s0 = inlined_call_operand.hbm [shape: f32[2,512], index: 0, kind: input, shape index: {}]
  %s1 = inlined_call_operand.hbm [shape: bf16[512,128], index: 1, kind: input, shape index: {}]
  %s2 = inlined_call_operand.vmem [shape: f32[1,128], index: 2, kind: input, shape index: {}]
  %s3 = inlined_call_operand.hbm [shape: s32[2,5], index: 3, kind: output, shape index: {}]
  %s4 = sld [smem:[#allocation0]]
  $region30: #{tpu_custom_call.1} parent=0
    _
  %s6 = ssub.s32 1, %s4
  %s7 = scalar_select 0, %s6, %s4
  $region1: #{tpu_custom_call.1} parent=0
    #allocation2 [shape = 'u8[4096]{0}', space=vmem, size = 0x1000, scoped, tag = 'input window, operand 0, single buffered']
    #allocation3 [shape = 's32[1]{0}', space=sflag, size = 0x4, scoped, tag = 'scoped memory for tpu_custom_call.1']
    #allocation4 [shape = 's32[1]{0}', space=sflag, size = 0x4, scoped, tag = 'scoped memory for tpu_custom_call.1']
    #allocation5 [shape = 'u8[131072]{0}', space=vmem, size = 0x20000, scoped, tag = 'input window, operand 1, single buffered']
    #allocation6 [shape = 's32[1]{0}', space=sflag, size = 0x4, scoped, tag = 'scoped memory for tpu_custom_call.1']
    #allocation7 [shape = 'u8[1024]{0}', space=vmem, size = 0x400, scoped, tag = 'output window, operand 0, single buffered']
    %8 = vsyncpa [#allocation3], 0
    %9 = vsyncpa [#allocation6], 0
    %10 = vsyncpa [#allocation4], 0
    // Predicated region
    $region2: #{tpu_custom_call.1} parent=1 // pred_check
      _
    $region3: #{tpu_custom_call.1} parent=1 // pred_check_branch
      %12 = sbr.rel (0) target = $region5
    $region4: #{tpu_custom_call.1} parent=1 // pred_region
      %s14 = ssub.s32 128, 128
      %15 = vsyncadd [#allocation3], %s14
      %s17 = sshll.u32 [#allocation2], 4
      %s18 = int_to_ptr.vmem [resolvable:$true] %s17
      %20 = dma.hbm_to_vmem [thread:$0]  %s0, 128, %s18, [#allocation3]
    $region5: #{tpu_custom_call.1} parent=1 // pred_fallthru
      _
    // Predicated region
    $region6: #{tpu_custom_call.1} parent=1 // pred_check
      _
    $region7: #{tpu_custom_call.1} parent=1 // pred_check_branch
      %22 = sbr.rel (0) target = $region9
    $region8: #{tpu_custom_call.1} parent=1 // pred_region
      %s24 = ssub.s32 4096, 4096
      %25 = vsyncadd [#allocation6], %s24
      %s26 = sshll.u32 [#allocation5], 4
      %s27 = int_to_ptr.vmem [resolvable:$true] %s26
      %32 = dma.hbm_to_vmem [thread:$0]  %s1, 4096, %s27, [#allocation6], 64, 64, 4
    $region9: #{tpu_custom_call.1} parent=1 // pred_fallthru
      _
    // Predicated region
    $region10: #{tpu_custom_call.1} parent=1 // pred_check
      _
    $region11: #{tpu_custom_call.1} parent=1 // pred_check_branch
      %34 = sbr.rel (0) target = $region13
    $region12: #{tpu_custom_call.1} parent=1 // pred_region
      _
    $region13: #{tpu_custom_call.1} parent=1 // pred_fallthru
      _
    // Predicated region
    $region14: #{tpu_custom_call.1} parent=1 // pred_check
      _
    $region15: #{tpu_custom_call.1} parent=1 // pred_check_branch
      %36 = sbr.rel (0) target = $region17
    $region16: #{tpu_custom_call.1} parent=1 // pred_region
      %37 = dma.done [#allocation3], 128
    $region17: #{tpu_custom_call.1} parent=1 // pred_fallthru
      _
    // Predicated region
    $region18: #{tpu_custom_call.1} parent=1 // pred_check
      _
    $region19: #{tpu_custom_call.1} parent=1 // pred_check_branch
      %39 = sbr.rel (0) target = $region21
    $region20: #{tpu_custom_call.1} parent=1 // pred_region
      %40 = dma.done [#allocation6], 4096
    $region21: #{tpu_custom_call.1} parent=1 // pred_fallthru
      _
    %v42 = vld [vmem:[#allocation2] sm:$0xff]
    %v44 = vcombine.high %v42, %v42
    %v46 = vunpack.c.l.s4 1983009808
    %v47 = vunpack.c.0.s8 %v46
    %v48 = vlaneseq
    %v49 = vshrl.u32 %v48, 7
    %v50 = vsub.s32 %v47, %v49
    %v51 = vrot.slane %v42, %v50
    %v53 = vunpack.c.l.s4 1983009808
    %v54 = vunpack.c.0.s8 %v53
    %v55 = vlaneseq
    %v56 = vshrl.u32 %v55, 7
    %v57 = vsub.s32 %v54, %v56
    %v58 = vrot.slane %v44, %v57
    %v59 = vcombine.high %v51, %v51
    %v60 = vcombine.high %v58, %v58
    %v65 = vpack.c.bf16 %v51, %v51
    %v66 = vpack.c.bf16 %v59, %v59
    %v67 = vpack.c.bf16 %v58, %v58
    %v68 = vpack.c.bf16 %v60, %v60
    %v69 = vld [vmem:[#allocation5] sm:$0xf]
    %v70 = vld [vmem:[#allocation5 + $0x4] sm:$0xf]
    %v71 = vld [vmem:[#allocation5 + $0x8] sm:$0xf]
    %v72 = vld [vmem:[#allocation5 + $0xc] sm:$0xf]
    %v73 = vld [vmem:[#allocation5 + $0x10] sm:$0xf]
    %v74 = vld [vmem:[#allocation5 + $0x14] sm:$0xf]
    %v75 = vld [vmem:[#allocation5 + $0x18] sm:$0xf]
    %v76 = vld [vmem:[#allocation5 + $0x1c] sm:$0xf]
    %v77 = vld [vmem:[#allocation5 + $0x20] sm:$0xf]
    %v78 = vld [vmem:[#allocation5 + $0x24] sm:$0xf]
    %v79 = vld [vmem:[#allocation5 + $0x28] sm:$0xf]
    %v80 = vld [vmem:[#allocation5 + $0x2c] sm:$0xf]
    %v81 = vld [vmem:[#allocation5 + $0x30] sm:$0xf]
    %v82 = vld [vmem:[#allocation5 + $0x34] sm:$0xf]
    %v83 = vld [vmem:[#allocation5 + $0x38] sm:$0xf]
    %v84 = vld [vmem:[#allocation5 + $0x3c] sm:$0xf]
    %v85 = vld [vmem:[#allocation5 + $0x40] sm:$0xf]
    %v86 = vld [vmem:[#allocation5 + $0x44] sm:$0xf]
    %v87 = vld [vmem:[#allocation5 + $0x48] sm:$0xf]
    %v88 = vld [vmem:[#allocation5 + $0x4c] sm:$0xf]
    %v89 = vld [vmem:[#allocation5 + $0x50] sm:$0xf]
    %v90 = vld [vmem:[#allocation5 + $0x54] sm:$0xf]
    %v91 = vld [vmem:[#allocation5 + $0x58] sm:$0xf]
    %v92 = vld [vmem:[#allocation5 + $0x5c] sm:$0xf]
    %v93 = vld [vmem:[#allocation5 + $0x60] sm:$0xf]
    %v94 = vld [vmem:[#allocation5 + $0x64] sm:$0xf]
    %v95 = vld [vmem:[#allocation5 + $0x68] sm:$0xf]
    %v96 = vld [vmem:[#allocation5 + $0x6c] sm:$0xf]
    %v97 = vld [vmem:[#allocation5 + $0x70] sm:$0xf]
    %v98 = vld [vmem:[#allocation5 + $0x74] sm:$0xf]
    %v99 = vld [vmem:[#allocation5 + $0x78] sm:$0xf]
    %v100 = vld [vmem:[#allocation5 + $0x7c] sm:$0xf]
    %v101 = vld [vmem:[#allocation5 + $0x80] sm:$0xf]
    %v102 = vld [vmem:[#allocation5 + $0x84] sm:$0xf]
    %v103 = vld [vmem:[#allocation5 + $0x88] sm:$0xf]
    %v104 = vld [vmem:[#allocation5 + $0x8c] sm:$0xf]
    %v105 = vld [vmem:[#allocation5 + $0x90] sm:$0xf]
    %v106 = vld [vmem:[#allocation5 + $0x94] sm:$0xf]
    %v107 = vld [vmem:[#allocation5 + $0x98] sm:$0xf]
    %v108 = vld [vmem:[#allocation5 + $0x9c] sm:$0xf]
    %v109 = vld [vmem:[#allocation5 + $0xa0] sm:$0xf]
    %v110 = vld [vmem:[#allocation5 + $0xa4] sm:$0xf]
    %v111 = vld [vmem:[#allocation5 + $0xa8] sm:$0xf]
    %v112 = vld [vmem:[#allocation5 + $0xac] sm:$0xf]
    %v113 = vld [vmem:[#allocation5 + $0xb0] sm:$0xf]
    %v114 = vld [vmem:[#allocation5 + $0xb4] sm:$0xf]
    %v115 = vld [vmem:[#allocation5 + $0xb8] sm:$0xf]
    %v116 = vld [vmem:[#allocation5 + $0xbc] sm:$0xf]
    %v117 = vld [vmem:[#allocation5 + $0xc0] sm:$0xf]
    %v118 = vld [vmem:[#allocation5 + $0xc4] sm:$0xf]
    %v119 = vld [vmem:[#allocation5 + $0xc8] sm:$0xf]
    %v120 = vld [vmem:[#allocation5 + $0xcc] sm:$0xf]
    %v121 = vld [vmem:[#allocation5 + $0xd0] sm:$0xf]
    %v122 = vld [vmem:[#allocation5 + $0xd4] sm:$0xf]
    %v123 = vld [vmem:[#allocation5 + $0xd8] sm:$0xf]
    %v124 = vld [vmem:[#allocation5 + $0xdc] sm:$0xf]
    %v125 = vld [vmem:[#allocation5 + $0xe0] sm:$0xf]
    %v126 = vld [vmem:[#allocation5 + $0xe4] sm:$0xf]
    %v127 = vld [vmem:[#allocation5 + $0xe8] sm:$0xf]
    %v128 = vld [vmem:[#allocation5 + $0xec] sm:$0xf]
    %v129 = vld [vmem:[#allocation5 + $0xf0] sm:$0xf]
    %v130 = vld [vmem:[#allocation5 + $0xf4] sm:$0xf]
    %v131 = vld [vmem:[#allocation5 + $0xf8] sm:$0xf]
    %v132 = vld [vmem:[#allocation5 + $0xfc] sm:$0xf]
    %v133 = vld [vmem:[%s2] sm:$0x1]
    %v135 = vlaneseq
    %v136 = vshrl.u32 %v135, 7
    %v137 = vsub.s32 0, %v136
    %v138 = vrot.slane %v133, %v137
    %v204 = vunpack.c.l.b16 %v69
    %v205 = vunpack.c.l.b16 %v70
    %v206 = vunpack.c.l.b16 %v71
    %v207 = vunpack.c.l.b16 %v72
    %v208 = vunpack.c.l.b16 %v73
    %v209 = vunpack.c.l.b16 %v74
    %v210 = vunpack.c.l.b16 %v75
    %v211 = vunpack.c.l.b16 %v76
    %v212 = vunpack.c.l.b16 %v77
    %v213 = vunpack.c.l.b16 %v78
    %v214 = vunpack.c.l.b16 %v79
    %v215 = vunpack.c.l.b16 %v80
    %v216 = vunpack.c.l.b16 %v81
    %v217 = vunpack.c.l.b16 %v82
    %v218 = vunpack.c.l.b16 %v83
    %v219 = vunpack.c.l.b16 %v84
    %v220 = vunpack.c.l.b16 %v85
    %v221 = vunpack.c.l.b16 %v86
    %v222 = vunpack.c.l.b16 %v87
    %v223 = vunpack.c.l.b16 %v88
    %v224 = vunpack.c.l.b16 %v89
    %v225 = vunpack.c.l.b16 %v90
    %v226 = vunpack.c.l.b16 %v91
    %v227 = vunpack.c.l.b16 %v92
    %v228 = vunpack.c.l.b16 %v93
    %v229 = vunpack.c.l.b16 %v94
    %v230 = vunpack.c.l.b16 %v95
    %v231 = vunpack.c.l.b16 %v96
    %v232 = vunpack.c.l.b16 %v97
    %v233 = vunpack.c.l.b16 %v98
    %v234 = vunpack.c.l.b16 %v99
    %v235 = vunpack.c.l.b16 %v100
    %v236 = vunpack.c.l.b16 %v101
    %v237 = vunpack.c.l.b16 %v102
    %v238 = vunpack.c.l.b16 %v103
    %v239 = vunpack.c.l.b16 %v104
    %v240 = vunpack.c.l.b16 %v105
    %v241 = vunpack.c.l.b16 %v106
    %v242 = vunpack.c.l.b16 %v107
    %v243 = vunpack.c.l.b16 %v108
    %v244 = vunpack.c.l.b16 %v109
    %v245 = vunpack.c.l.b16 %v110
    %v246 = vunpack.c.l.b16 %v111
    %v247 = vunpack.c.l.b16 %v112
    %v248 = vunpack.c.l.b16 %v113
    %v249 = vunpack.c.l.b16 %v114
    %v250 = vunpack.c.l.b16 %v115
    %v251 = vunpack.c.l.b16 %v116
    %v252 = vunpack.c.l.b16 %v117
    %v253 = vunpack.c.l.b16 %v118
    %v254 = vunpack.c.l.b16 %v119
    %v255 = vunpack.c.l.b16 %v120
    %v256 = vunpack.c.l.b16 %v121
    %v257 = vunpack.c.l.b16 %v122
    %v258 = vunpack.c.l.b16 %v123
    %v259 = vunpack.c.l.b16 %v124
    %v260 = vunpack.c.l.b16 %v125
    %v261 = vunpack.c.l.b16 %v126
    %v262 = vunpack.c.l.b16 %v127
    %v263 = vunpack.c.l.b16 %v128
    %v264 = vunpack.c.l.b16 %v129
    %v265 = vunpack.c.l.b16 %v130
    %v266 = vunpack.c.l.b16 %v131
    %v267 = vunpack.c.l.b16 %v132
    %v268 = vpack.c.b16 %v205, %v204
    %v269 = vpack.c.b16 %v207, %v206
    %v270 = vpack.c.b16 %v209, %v208
    %v271 = vpack.c.b16 %v211, %v210
    %v272 = vpack.c.b16 %v213, %v212
    %v273 = vpack.c.b16 %v215, %v214
    %v274 = vpack.c.b16 %v217, %v216
    %v275 = vpack.c.b16 %v219, %v218
    %v276 = vpack.c.b16 %v221, %v220
    %v277 = vpack.c.b16 %v223, %v222
    %v278 = vpack.c.b16 %v225, %v224
    %v279 = vpack.c.b16 %v227, %v226
    %v280 = vpack.c.b16 %v229, %v228
    %v281 = vpack.c.b16 %v231, %v230
    %v282 = vpack.c.b16 %v233, %v232
    %v283 = vpack.c.b16 %v235, %v234
    %v284 = vpack.c.b16 %v237, %v236
    %v285 = vpack.c.b16 %v239, %v238
    %v286 = vpack.c.b16 %v241, %v240
    %v287 = vpack.c.b16 %v243, %v242
    %v288 = vpack.c.b16 %v245, %v244
    %v289 = vpack.c.b16 %v247, %v246
    %v290 = vpack.c.b16 %v249, %v248
    %v291 = vpack.c.b16 %v251, %v250
    %v292 = vpack.c.b16 %v253, %v252
    %v293 = vpack.c.b16 %v255, %v254
    %v294 = vpack.c.b16 %v257, %v256
    %v295 = vpack.c.b16 %v259, %v258
    %v296 = vpack.c.b16 %v261, %v260
    %v297 = vpack.c.b16 %v263, %v262
    %v298 = vpack.c.b16 %v265, %v264
    %v299 = vpack.c.b16 %v267, %v266
    %332 = vmatprep.subr.bf16.mxu0 0
    %333 = vmatpush1.bf16.msra.mxu0 %v268
    %334 = vmatprep.subr.bf16.mxu0 0
    %335 = vmatpush1.bf16.msra.mxu0 %v269
    %336 = vmatprep.subr.bf16.mxu0 0
    %337 = vmatpush1.bf16.msra.mxu0 %v270
    %338 = vmatprep.subr.bf16.mxu0 0
    %339 = vmatpush1.bf16.msra.mxu0 %v271
    %340 = vmatprep.subr.bf16.mxu0 0
    %341 = vmatpush1.bf16.msra.mxu0 %v272
    %342 = vmatprep.subr.bf16.mxu0 0
    %343 = vmatpush1.bf16.msra.mxu0 %v273
    %344 = vmatprep.subr.bf16.mxu0 0
    %345 = vmatpush1.bf16.msra.mxu0 %v274
    %346 = vmatprep.subr.bf16.mxu0 0
    %347 = vmatpush1.bf16.msra.mxu0 %v275
    %348 = vmatprep.subr.bf16.mxu0 0
    %349 = vmatpush1.bf16.msra.mxu0 %v276
    %350 = vmatprep.subr.bf16.mxu0 0
    %351 = vmatpush1.bf16.msra.mxu0 %v277
    %352 = vmatprep.subr.bf16.mxu0 0
    %353 = vmatpush1.bf16.msra.mxu0 %v278
    %354 = vmatprep.subr.bf16.mxu0 0
    %355 = vmatpush1.bf16.msra.mxu0 %v279
    %356 = vmatprep.subr.bf16.mxu0 0
    %357 = vmatpush1.bf16.msra.mxu0 %v280
    %358 = vmatprep.subr.bf16.mxu0 0
    %359 = vmatpush1.bf16.msra.mxu0 %v281
    %360 = vmatprep.subr.bf16.mxu0 0
    %361 = vmatpush1.bf16.msra.mxu0 %v282
    %362 = vmatprep.subr.bf16.mxu0 0
    %363 = vmatpush1.bf16.msra.mxu0 %v283
    %364 = vmatprep.mubr.bf16.mxu0 %v66
    %365 = vmatmul.mubr.bf16.gmra.mrb[0].mxu0 %v65
    %v366 = vpop.f32.mrb[0].mxu0
    %v367 = vadd.f32 %v138, %v366
    %v368 = vpop.f32.mrb[0].mxu0
    %v369 = vpop.f32.mrb[0].mxu0
    %v370 = vpop.f32.mrb[0].mxu0
    %371 = vdwg.mxu0
    %372 = vmatprep.subr.bf16.mxu0 0
    %373 = vmatpush1.bf16.msra.mxu0 %v284
    %374 = vmatprep.subr.bf16.mxu0 0
    %375 = vmatpush1.bf16.msra.mxu0 %v285
    %376 = vmatprep.subr.bf16.mxu0 0
    %377 = vmatpush1.bf16.msra.mxu0 %v286
    %378 = vmatprep.subr.bf16.mxu0 0
    %379 = vmatpush1.bf16.msra.mxu0 %v287
    %380 = vmatprep.subr.bf16.mxu0 0
    %381 = vmatpush1.bf16.msra.mxu0 %v288
    %382 = vmatprep.subr.bf16.mxu0 0
    %383 = vmatpush1.bf16.msra.mxu0 %v289
    %384 = vmatprep.subr.bf16.mxu0 0
    %385 = vmatpush1.bf16.msra.mxu0 %v290
    %386 = vmatprep.subr.bf16.mxu0 0
    %387 = vmatpush1.bf16.msra.mxu0 %v291
    %388 = vmatprep.subr.bf16.mxu0 0
    %389 = vmatpush1.bf16.msra.mxu0 %v292
    %390 = vmatprep.subr.bf16.mxu0 0
    %391 = vmatpush1.bf16.msra.mxu0 %v293
    %392 = vmatprep.subr.bf16.mxu0 0
    %393 = vmatpush1.bf16.msra.mxu0 %v294
    %394 = vmatprep.subr.bf16.mxu0 0
    %395 = vmatpush1.bf16.msra.mxu0 %v295
    %396 = vmatprep.subr.bf16.mxu0 0
    %397 = vmatpush1.bf16.msra.mxu0 %v296
    %398 = vmatprep.subr.bf16.mxu0 0
    %399 = vmatpush1.bf16.msra.mxu0 %v297
    %400 = vmatprep.subr.bf16.mxu0 0
    %401 = vmatpush1.bf16.msra.mxu0 %v298
    %402 = vmatprep.subr.bf16.mxu0 0
    %403 = vmatpush1.bf16.msra.mxu0 %v299
    %404 = vmatprep.mubr.bf16.mxu0 %v68
    %405 = vmatmul.mubr.bf16.gmra.mrb[0].mxu0 %v67
    %v406 = vpop.f32.mrb[0].mxu0
    %v407 = vadd.f32 %v367, %v406
    %v408 = vpop.f32.mrb[0].mxu0
    %v409 = vpop.f32.mrb[0].mxu0
    %v410 = vpop.f32.mrb[0].mxu0
    %411 = vdwg.mxu0
    %v412 = vlaneseq
    %v413 = vand.u32 %v412, 127
    %vm414 = vcmask 1041408
    %v415 = vsel %vm414, %v407, -inf
    %416 = vmax.xlane.f32.xlu0 %v415
    %v417 = vpop.xlane.xlu0 %416
    %vm418 = vcmp.eq.f32.partialorder %v407, %v417
    %v419 = vsel %vm418, %v413, 128
    %v420 = vsel %vm414, %v419, 2147483647
    %v421 = vand.u32 %v420, 65535
    %v422 = vshra.s32 %v420, 16
    %v423 = vcvt.s32.f32 %v421
    %v424 = vcvt.s32.f32 %v422
    %425 = vmin.xlane.f32.xlu0 %v424
    %v426 = vpop.xlane.xlu0 %425
    %vm427 = vcmp.eq.f32.partialorder %v424, %v426
    %v428 = vsel %vm427, %v423, inf
    %429 = vmin.xlane.f32.xlu0 %v428
    %v430 = vpop.xlane.xlu0 %429
    %v431 = vcvt.f32.s32 %v430
    %v432 = vcvt.f32.s32 %v426
    %v433 = vshll.u32 %v432, 16
    %v434 = vadd.s32 %v433, %v431
    %vm435 = vcmp.eq.s32.totalorder %v413, 0
    %v436 = vsel %vm435, %v434, 0
    %vm437 = vcmp.eq.s32.totalorder %v413, %v434
    %v438 = vsel %vm437, -inf, %v407
    %v439 = vsel %vm414, %v438, -inf
    %440 = vmax.xlane.f32.xlu0 %v439
    %v441 = vpop.xlane.xlu0 %440
    %vm442 = vcmp.eq.f32.partialorder %v438, %v441
    %v443 = vsel %vm442, %v413, 128
    %v444 = vsel %vm414, %v443, 2147483647
    %v445 = vand.u32 %v444, 65535
    %v446 = vshra.s32 %v444, 16
    %v447 = vcvt.s32.f32 %v445
    %v448 = vcvt.s32.f32 %v446
    %449 = vmin.xlane.f32.xlu0 %v448
    %v450 = vpop.xlane.xlu0 %449
    %vm451 = vcmp.eq.f32.partialorder %v448, %v450
    %v452 = vsel %vm451, %v447, inf
    %453 = vmin.xlane.f32.xlu0 %v452
    %v454 = vpop.xlane.xlu0 %453
    %v455 = vcvt.f32.s32 %v454
    %v456 = vcvt.f32.s32 %v450
    %v457 = vshll.u32 %v456, 16
    %v458 = vadd.s32 %v457, %v455
    %vm459 = vcmp.eq.s32.totalorder %v413, 1
    %v460 = vsel %vm459, %v458, %v436
    %vm461 = vcmp.eq.s32.totalorder %v413, %v458
    %v462 = vsel %vm461, -inf, %v438
    %v463 = vsel %vm414, %v462, -inf
    %464 = vmax.xlane.f32.xlu0 %v463
    %v465 = vpop.xlane.xlu0 %464
    %vm466 = vcmp.eq.f32.partialorder %v462, %v465
    %v467 = vsel %vm466, %v413, 128
    %v468 = vsel %vm414, %v467, 2147483647
    %v469 = vand.u32 %v468, 65535
    %v470 = vshra.s32 %v468, 16
    %v471 = vcvt.s32.f32 %v469
    %v472 = vcvt.s32.f32 %v470
    %473 = vmin.xlane.f32.xlu0 %v472
    %v474 = vpop.xlane.xlu0 %473
    %vm475 = vcmp.eq.f32.partialorder %v472, %v474
    %v476 = vsel %vm475, %v471, inf
    %477 = vmin.xlane.f32.xlu0 %v476
    %v478 = vpop.xlane.xlu0 %477
    %v479 = vcvt.f32.s32 %v478
    %v480 = vcvt.f32.s32 %v474
    %v481 = vshll.u32 %v480, 16
    %v482 = vadd.s32 %v481, %v479
    %vm483 = vcmp.eq.s32.totalorder %v413, 2
    %v484 = vsel %vm483, %v482, %v460
    %vm485 = vcmp.eq.s32.totalorder %v413, %v482
    %v486 = vsel %vm485, -inf, %v462
    %v487 = vsel %vm414, %v486, -inf
    %488 = vmax.xlane.f32.xlu0 %v487
    %v489 = vpop.xlane.xlu0 %488
    %vm490 = vcmp.eq.f32.partialorder %v486, %v489
    %v491 = vsel %vm490, %v413, 128
    %v492 = vsel %vm414, %v491, 2147483647
    %v493 = vand.u32 %v492, 65535
    %v494 = vshra.s32 %v492, 16
    %v495 = vcvt.s32.f32 %v493
    %v496 = vcvt.s32.f32 %v494
    %497 = vmin.xlane.f32.xlu0 %v496
    %v498 = vpop.xlane.xlu0 %497
    %vm499 = vcmp.eq.f32.partialorder %v496, %v498
    %v500 = vsel %vm499, %v495, inf
    %501 = vmin.xlane.f32.xlu0 %v500
    %v502 = vpop.xlane.xlu0 %501
    %v503 = vcvt.f32.s32 %v502
    %v504 = vcvt.f32.s32 %v498
    %v505 = vshll.u32 %v504, 16
    %v506 = vadd.s32 %v505, %v503
    %vm507 = vcmp.eq.s32.totalorder %v413, 3
    %v508 = vsel %vm507, %v506, %v484
    %vm509 = vcmp.eq.s32.totalorder %v413, %v506
    %v510 = vsel %vm509, -inf, %v486
    %v511 = vsel %vm414, %v510, -inf
    %512 = vmax.xlane.f32.xlu0 %v511
    %v513 = vpop.xlane.xlu0 %512
    %vm514 = vcmp.eq.f32.partialorder %v510, %v513
    %v515 = vsel %vm514, %v413, 128
    %v516 = vsel %vm414, %v515, 2147483647
    %v517 = vand.u32 %v516, 65535
    %v518 = vshra.s32 %v516, 16
    %v519 = vcvt.s32.f32 %v517
    %v520 = vcvt.s32.f32 %v518
    %521 = vmin.xlane.f32.xlu0 %v520
    %v522 = vpop.xlane.xlu0 %521
    %vm523 = vcmp.eq.f32.partialorder %v520, %v522
    %v524 = vsel %vm523, %v519, inf
    %525 = vmin.xlane.f32.xlu0 %v524
    %v526 = vpop.xlane.xlu0 %525
    %v527 = vcvt.f32.s32 %v526
    %v528 = vcvt.f32.s32 %v522
    %v529 = vshll.u32 %v528, 16
    %v530 = vadd.s32 %v529, %v527
    %vm531 = vcmp.eq.s32.totalorder %v413, 4
    %v532 = vsel %vm531, %v530, %v508
    %vm533 = vcmask 33792
    %534 = vst.msk [vmem:[#allocation7] sm:$0x3] %vm533, %v532
    // Predicated region
    $region22: #{tpu_custom_call.1} parent=1 // pred_check
      _
    $region23: #{tpu_custom_call.1} parent=1 // pred_check_branch
      %536 = sbr.rel (0) target = $region25
    $region24: #{tpu_custom_call.1} parent=1 // pred_region
      %s538 = ssub.s32 32, 32
      %539 = vsyncadd [#allocation4], %s538
      %s541 = sshll.u32 [#allocation7], 4
      %s542 = int_to_ptr.vmem [resolvable:$true] %s541
      %544 = dma.vmem_to_hbm [thread:$0]  %s542, 32, %s3, [#allocation4]
    $region25: #{tpu_custom_call.1} parent=1 // pred_fallthru
      _
    // Predicated region
    $region26: #{tpu_custom_call.1} parent=1 // pred_check
      _
    $region27: #{tpu_custom_call.1} parent=1 // pred_check_branch
      %546 = sbr.rel (0) target = $region29
    $region28: #{tpu_custom_call.1} parent=1 // pred_region
      %547 = dma.done [#allocation4], 32
    $region29: #{tpu_custom_call.1} parent=1 // pred_fallthru
      _
    %548 = vsyncpa [#allocation3], 1
    %549 = vsyncpa [#allocation6], 1
    %550 = vsyncpa [#allocation4], 1

</llo_original>
